<compile_context>
chip_gen: v7x
topology: tpu7x:2x2x1
jax: 0.10.0
libtpu: 0.0.40
codegen_flags: <defaults>
</compile_context>

<pallas_src>
import jax
import jax.numpy as jnp
from jax.experimental import pallas as pl
from jax.experimental.pallas import tpu as pltpu

SIZES = (1, 2, 3, 6)


# ----------------------------- Pallas kernel --------------------------------
def _bottleneck_kernel(x_ref, w_ref, b_ref, o_ref, acc_ref):
    """One (tm, tk) @ (tk, OUTp) partial matmul; bias + ReLU on the last K step."""
    k = pl.program_id(1)

    @pl.when(k == 0)
    def _():
        acc_ref[...] = jnp.zeros_like(acc_ref)

    # bf16 x bf16 operands, f32 accumulation on the MXU.
    acc_ref[...] += jnp.dot(x_ref[...], w_ref[...],
                            preferred_element_type=jnp.float32)

    @pl.when(k == pl.num_programs(1) - 1)
    def _():
        o_ref[...] = jnp.maximum(acc_ref[...] + b_ref[...], 0.0).astype(o_ref.dtype)


def _pick_tk(K, tk_max=512):
    """Largest multiple of 128 (<= tk_max) dividing K; otherwise the full K."""
    if K % 128 == 0:
        for cand in range((min(tk_max, K) // 128) * 128, 0, -128):
            if K % cand == 0:
                return cand
    return K


def bottleneck_conv1x1_relu(x2d, w, b, *, tm=512, tk_max=512):
    """ReLU((M, K) @ (K, OUT) + b) with bf16 operands and f32 accumulation.

    x2d: (M, K) f32, w: (K, OUT) f32, b: (OUT,) f32 -> (M, OUT) f32.
    """
    M, K = x2d.shape
    OUT = w.shape[1]

    # Lane-dense output: pad OUT (weight columns + bias) up to a multiple of 128.
    OUTp = pl.cdiv(OUT, 128) * 128
    if OUTp != OUT:
        w = jnp.pad(w, ((0, 0), (0, OUTp - OUT)))
        b = jnp.pad(b, ((0, OUTp - OUT),))
    b2 = b.reshape(1, OUTp).astype(jnp.float32)

    # bf16 operands feed the MXU at full rate and halve HBM/VMEM traffic.
    x_bf = x2d.astype(jnp.bfloat16)
    w_bf = w.astype(jnp.bfloat16)

    # Tile sizes: tm large (amortize per-step overhead / bias / ReLU), but capped
    # so the "parallel" M axis exposes >= 2 blocks for megacore; K is tiled so
    # the VMEM footprint is shape-independent (fits v7x's 64 MiB as well).
    tm = min(tm, M)
    if tm < M:
        tm = max(8, (tm // 8) * 8)
    while tm >= 512 and pl.cdiv(M, tm) < 2:
        tm //= 2
    tk = _pick_tk(K, tk_max)
    n_m = pl.cdiv(M, tm)      # tail M block handled by Pallas masking (no jnp.pad)
    n_k = K // tk

    # Double-buffered inputs/outputs + f32 accumulator, with headroom.
    vmem_bytes = (2 * tm * tk * 2          # x tiles (bf16)
                  + 2 * tk * OUTp * 2      # w tiles (bf16)
                  + 2 * OUTp * 4           # bias
                  + 2 * tm * OUTp * 4      # output tiles (f32)
                  + tm * OUTp * 4)         # accumulator scratch
    vmem_limit = int(min(64 << 20, max(8 << 20, 2 * vmem_bytes)))

    out = pl.pallas_call(
        _bottleneck_kernel,
        out_shape=jax.ShapeDtypeStruct((M, OUTp), jnp.float32),
        grid_spec=pltpu.PrefetchScalarGridSpec(
            num_scalar_prefetch=0,
            grid=(n_m, n_k),                                   # reduction axis last
            in_specs=[
                pl.BlockSpec((tm, tk), lambda i, k: (i, k)),     # activation tile
                pl.BlockSpec((tk, OUTp), lambda i, k: (k, 0)),   # weight K-slice
                pl.BlockSpec((1, OUTp), lambda i, k: (0, 0)),    # bias row
            ],
            out_specs=pl.BlockSpec((tm, OUTp), lambda i, k: (i, 0)),
            scratch_shapes=[pltpu.VMEM((tm, OUTp), jnp.float32)],
        ),
        compiler_params=pltpu.CompilerParams(
            dimension_semantics=("parallel", "arbitrary"),
            vmem_limit_bytes=vmem_limit),
    )(x_bf, w_bf, b2)

    return out[:, :OUT] if OUTp != OUT else out


# ------------------------------ JAX glue -------------------------------------
def adaptive_avg_pool_nhwc(x, s):
    """PyTorch-style AdaptiveAvgPool2d to (s, s). x: (N, H, W, C) -> (N, s, s, C)."""
    _, H, W, _ = x.shape

    def pool(arr, axis, in_len):
        chunks = []
        for i in range(s):
            start = (i * in_len) // s
            end = ((i + 1) * in_len + s - 1) // s  # ceil
            sl = [slice(None)] * 4
            sl[axis] = slice(start, end)
            chunks.append(arr[tuple(sl)].mean(axis=axis, keepdims=True))
        return jnp.concatenate(chunks, axis=axis)

    return pool(pool(x, 1, H), 2, W)


def bilinear_matrix(out_len, in_len):
    """Interpolation matrix U (out_len, in_len): up = U @ x (align_corners=False)."""
    if in_len == 1:
        return jnp.ones((out_len, 1), jnp.float32)
    scale = in_len / out_len
    dst = jnp.arange(out_len, dtype=jnp.float32)
    src = (dst + 0.5) * scale - 0.5
    src = jnp.clip(src, 0.0, None)
    i0 = jnp.minimum(jnp.floor(src).astype(jnp.int32), in_len - 1)
    i1 = jnp.minimum(i0 + 1, in_len - 1)
    lam = src - i0.astype(jnp.float32)
    m = jnp.zeros((out_len, in_len), jnp.float32)
    rows = jnp.arange(out_len)
    m = m.at[rows, i0].add(1.0 - lam)
    m = m.at[rows, i1].add(lam)
    return m


def init_psp_params(key, features, out_features):
    ks = jax.random.split(key, len(SIZES) + 2)
    stage_ws = [
        jax.random.normal(ks[i], (features, features), jnp.float32) * 0.1
        for i in range(len(SIZES))
    ]
    k_in = features * (len(SIZES) + 1)
    bottleneck_w = jax.random.normal(
        ks[len(SIZES)], (out_features, k_in), jnp.float32) * 0.1  # (OUT, K) like Conv2d
    bottleneck_b = jax.random.normal(
        ks[len(SIZES) + 1], (out_features,), jnp.float32) * 0.1
    return {"stage_ws": stage_ws,
            "bottleneck_w": bottleneck_w,
            "bottleneck_b": bottleneck_b}


def psp_forward(feats, params):
    """feats: (N, C, H, W) f32 -> (N, OUT, H, W) f32 (plus NHWC concat for checks).

    The head is kept channels-last so the concatenated features feed the Pallas
    matmul as a contiguous (M, K) slab with no transpose of the big tensor.
    """
    N, C, H, W = feats.shape
    x = feats.transpose(0, 2, 3, 1)                                # (N, H, W, C)
    priors = []
    for s, w_stage in zip(SIZES, params["stage_ws"]):
        pooled = adaptive_avg_pool_nhwc(x, s)                      # (N, s, s, C)
        conved = jnp.einsum("nijc,oc->nijo", pooled, w_stage)      # 1x1 conv, no bias
        Uh = bilinear_matrix(H, s)
        Uw = bilinear_matrix(W, s)
        up = jnp.einsum("hi,nijo,wj->nhwo", Uh, conved, Uw)        # bilinear upsample
        priors.append(up)
    priors.append(x)
    cat = jnp.concatenate(priors, axis=-1)                         # (N, H, W, 5C)

    K = cat.shape[-1]
    x2d = cat.reshape(N * H * W, K)                                # no transpose needed

    # Hot path: bottleneck 1x1 conv + bias + ReLU in the Pallas kernel.
    y2d = bottleneck_conv1x1_relu(
        x2d, params["bottleneck_w"].T, params["bottleneck_b"])
    out = y2d.reshape(N, H, W, -1).transpose(0, 3, 1, 2)           # back to NCHW
    return out, cat


if __name__ == "__main__":
    key = jax.random.PRNGKey(0)
    k_x, k_p = jax.random.split(key)

    N, C, H, W = 2, 4, 16, 16
    OUT = 32  # small stand-in for out_features=1024 (padded to 128 lanes inside)

    feats = jax.random.normal(k_x, (N, C, H, W), jnp.float32)
    params = init_psp_params(k_p, C, OUT)

    out, cat = psp_forward(feats, params)
    out = jax.block_until_ready(out)

    # Pure-JAX f32 reference for the bottleneck stage.  The kernel runs bf16
    # operands with f32 accumulation, so tolerances are loosened accordingly.
    ref = jnp.maximum(
        jnp.einsum("nhwk,ok->nohw", cat, params["bottleneck_w"])
        + params["bottleneck_b"][None, :, None, None],
        0.0,
    )
    assert out.shape == (N, OUT, H, W)
    err = float(jnp.max(jnp.abs(out - ref)))
    assert jnp.allclose(out, ref, atol=5e-2, rtol=5e-2), err

    print("KERNEL_OK")
</pallas_src>

<mosaic_0001>
module attributes {stable_mosaic.version = 11 : i64} {
  func.func @_bottleneck_kernel(%arg0: i32, %arg1: i32, %arg2: memref<256x20xbf16, #tpu.memory_space<vmem>>, %arg3: memref<20x128xbf16, #tpu.memory_space<vmem>>, %arg4: memref<1x128xf32, #tpu.memory_space<vmem>>, %arg5: memref<256x128xf32, #tpu.memory_space<vmem>>, %arg6: memref<256x128xf32, #tpu.memory_space<vmem>>) attributes {dimension_semantics = [#tpu.dimension_semantics<parallel>, #tpu.dimension_semantics<arbitrary>], iteration_bounds = array<i64: 2, 1>, scalar_prefetch = 0 : i64, scratch_operands = 1 : i64, tpu.core_type = #tpu.core_type<tc>, window_params = [{transform_indices = @transform_0, window_bounds = array<i64: 256, 20>}, {transform_indices = @transform_1, window_bounds = array<i64: 20, 128>}, {pipeline_mode = #tpu.pipeline_mode<synchronous>, transform_indices = @transform_2, window_bounds = array<i64: 1, 128>}, {transform_indices = @transform_3, window_bounds = array<i64: 256, 128>}]} {
    %c0_i32 = arith.constant 0 : i32
    %0 = arith.cmpi eq, %arg1, %c0_i32 : i32
    %1 = arith.extui %0 : i1 to i32
    %c0_i32_0 = arith.constant 0 : i32
    %2 = arith.cmpi ne, %1, %c0_i32_0 : i32
    scf.if %2 {
      %cst_10 = arith.constant 0.000000e+00 : f32
      %12 = vector.broadcast %cst_10 : f32 to vector<256x128xf32>
      %c0_11 = arith.constant 0 : index
      %c0_12 = arith.constant 0 : index
      %13 = vector.load %arg6[%c0_11, %c0_12] : memref<256x128xf32, #tpu.memory_space<vmem>>, vector<256x128xf32>
      tpu.vector_store %arg6[%c0_11, %c0_12], %12 {strides = array<i32>} : memref<256x128xf32, #tpu.memory_space<vmem>>, vector<256x128xf32>,
    } else {
    }
    %c0 = arith.constant 0 : index
    %c0_1 = arith.constant 0 : index
    %3 = vector.load %arg6[%c0, %c0_1] : memref<256x128xf32, #tpu.memory_space<vmem>>, vector<256x128xf32>
    %c0_2 = arith.constant 0 : index
    %c0_3 = arith.constant 0 : index
    %4 = vector.load %arg2[%c0_2, %c0_3] : memref<256x20xbf16, #tpu.memory_space<vmem>>, vector<256x20xbf16>
    %c0_4 = arith.constant 0 : index
    %c0_5 = arith.constant 0 : index
    %5 = vector.load %arg3[%c0_4, %c0_5] : memref<20x128xbf16, #tpu.memory_space<vmem>>, vector<20x128xbf16>
    %cst = arith.constant dense<0.000000e+00> : vector<256x128xf32>
    %6 = tpu.matmul %4, %5, %cst {dimension_numbers = #tpu.dot_dimension_numbers<[1], [0], [0], [1], [0, 0, 1, 1], [], []>} : vector<256x20xbf16>, vector<20x128xbf16>, vector<256x128xf32> -> vector<256x128xf32>
    %7 = arith.addf %3, %6 : vector<256x128xf32>
    %c0_6 = arith.constant 0 : index
    %c0_7 = arith.constant 0 : index
    %8 = vector.load %arg6[%c0_6, %c0_7] : memref<256x128xf32, #tpu.memory_space<vmem>>, vector<256x128xf32>
    tpu.vector_store %arg6[%c0_6, %c0_7], %7 {strides = array<i32>} : memref<256x128xf32, #tpu.memory_space<vmem>>, vector<256x128xf32>,
    %c0_i32_8 = arith.constant 0 : i32
    %9 = arith.cmpi eq, %arg1, %c0_i32_8 : i32
    %10 = arith.extui %9 : i1 to i32
    %c0_i32_9 = arith.constant 0 : i32
    %11 = arith.cmpi ne, %10, %c0_i32_9 : i32
    scf.if %11 {
      %c0_10 = arith.constant 0 : index
      %c0_11 = arith.constant 0 : index
      %12 = vector.load %arg6[%c0_10, %c0_11] : memref<256x128xf32, #tpu.memory_space<vmem>>, vector<256x128xf32>
      %c0_12 = arith.constant 0 : index
      %c0_13 = arith.constant 0 : index
      %13 = vector.load %arg4[%c0_12, %c0_13] : memref<1x128xf32, #tpu.memory_space<vmem>>, vector<1x128xf32>
      %14 = vector.broadcast %13 : vector<1x128xf32> to vector<256x128xf32>
      %15 = arith.addf %12, %14 : vector<256x128xf32>
      %cst_14 = arith.constant 0.000000e+00 : f32
      %16 = vector.broadcast %cst_14 : f32 to vector<256x128xf32>
      %17 = arith.maximumf %15, %16 : vector<256x128xf32>
      %c0_15 = arith.constant 0 : index
      %c0_16 = arith.constant 0 : index
      %18 = vector.load %arg5[%c0_15, %c0_16] : memref<256x128xf32, #tpu.memory_space<vmem>>, vector<256x128xf32>
      tpu.vector_store %arg5[%c0_15, %c0_16], %17 {strides = array<i32>} : memref<256x128xf32, #tpu.memory_space<vmem>>, vector<256x128xf32>,
    } else {
    }
    return
  }
  func.func @transform_0(%arg0: i32, %arg1: i32) -> (i32, i32) {
    %c0_i32 = arith.constant 0 : i32
    return %arg0, %arg1 : i32, i32
  }
  func.func @transform_1(%arg0: i32, %arg1: i32) -> (i32, i32) {
    %c0_i32 = arith.constant 0 : i32
    %c0_i32_0 = arith.constant 0 : i32
    return %arg1, %c0_i32 : i32, i32
  }
  func.func @transform_2(%arg0: i32, %arg1: i32) -> (i32, i32) {
    %c0_i32 = arith.constant 0 : i32
    %c0_i32_0 = arith.constant 0 : i32
    %c0_i32_1 = arith.constant 0 : i32
    return %c0_i32, %c0_i32_0 : i32, i32
  }
  func.func @transform_3(%arg0: i32, %arg1: i32) -> (i32, i32) {
    %c0_i32 = arith.constant 0 : i32
    %c0_i32_0 = arith.constant 0 : i32
    return %arg0, %c0_i32 : i32, i32
  }
}

</mosaic_0001>

<llo_original>
// kernel: tpu_custom_call.1
$region0: #{tpu_custom_call.1}
  #allocation0 [shape = 'u32[]', space=smem, size = 0x4, offset = 0x4, fixed_abs, tag = 'smem constant byte address 0x4 - core index']
  #allocation1 [shape = 'u32[144,128]{1,0:T(1,128)}', space=vmem, size = 0x12000, scoped, tag = 'internal scratch']
  #allocation2 [shape = 'f32[256,128]{1,0:T(8,128)}', space=vmem, size = 0x20000, scoped, tag = 'scratch operand']
  %s0 = inlined_call_operand.vmem [shape: bf16[512,20], index: 0, kind: input, shape index: {}]
  %s1 = inlined_call_operand.vmem [shape: bf16[20,128], index: 1, kind: input, shape index: {}]
  %s2 = inlined_call_operand.vmem [shape: f32[1,128], index: 2, kind: input, shape index: {}]
  %s3 = inlined_call_operand.hbm [shape: f32[512,128], index: 3, kind: output, shape index: {}]
  %s4 = sld [smem:[#allocation0]]
  $region53: #{tpu_custom_call.1} parent=0
    _
  %s6 = ssub.s32 1, %s4
  %s7 = scalar_select 0, %s6, %s4
  $region1: #{tpu_custom_call.1} parent=0
    #allocation3 [shape = 'u8[262144]{0}', space=vmem, size = 0x40000, scoped, tag = 'output window, operand 0']
    #allocation4 [shape = 's32[2]{0}', space=sflag, size = 0x8, scoped, tag = 'scoped memory for tpu_custom_call.1']
    %8 = vsyncpa [#allocation4], 0
    %s9 = scalar_lea.sflag [#allocation4], 1
    %10 = vsyncpa %s9, 0
    loop: start=0, step=1, limit=4
    $region2: #{tpu_custom_call.1} parent=1 // loop_pre_header
      _
    $region3: #{tpu_custom_call.1} parent=1 // loop_header
      %s12 = sphi 0, %s16
      %p13 = scmp.ge.s32.totalorder %s12, 4
      %s19 = sphi 0, %s31
      %s20 = sphi 0, %s27
      %s21 = sphi 0, %s19
      %s22 = sphi 0, %s20
      %s23 = sphi 0, %s21
      %s24 = sphi 0, %s22
      %s36 = sphi 0, %s38
      %s39 = sphi 0, %s36
      %s40 = sphi 0, %s39
      %s56 = sphi 0, %s40
      %s62 = sphi 0, %s64
      %s65 = sphi 0, %s62
      %s66 = sphi 0, %s65
      %s82 = sphi 0, %s66
      %s86 = sphi 0, %s86
      %s88 = sphi 0, %s86
      %s89 = sphi 0, %s88
      %s103 = sphi 0, %s89
      %s109 = sphi 0, %s111
      %s112 = sphi 0, %s109
      %s113 = sphi 0, %s112
      %s129 = sphi 0, %s113
    $region4: #{tpu_custom_call.1} parent=1 // loop_header_branch
      %15 = sbr.rel (%p13) target = $region8
    $region5: #{tpu_custom_call.1} parent=1 // loop_body
      %s17 = ssub.s32 %s12, 1
      %s18 = ssub.s32 %s12, 2
      %s25 = sadd.s32 1, %s20
      %p26 = scmp.ge.s32.totalorder %s25, 1
      %s27 = scalar_select %p26, 0, %s25
      %s28 = sadd.s32 1, %s19
      %s29 = scalar_select %p26, %s28, %s19
      %p30 = scmp.ge.s32.totalorder %s29, 2
      %s31 = scalar_select %p30, 0, %s29
      %s32 = ssub.s32 %s19, %s31
      %s33 = ssub.s32 %s20, %s27
      %s34 = sor.u32 %s32, %s33
      %p35 = scmp.eq.s32.totalorder %s34, 0
      %s37 = sadd.s32 %s36, 1
      %s38 = scalar_select %p35, %s36, %s37
      %p41 = pneg %p35
      %p42 = scmp.eq.s32.totalorder %s12, 1
      %p43 = por %p41, %p42
      %p44 = scmp.ne.s32.totalorder %s36, %s39
      %p45 = scmp.eq.s32.totalorder %s12, 0
      %p46 = por %p44, %p45
      %p47 = scmp.ne.s32.totalorder %s36, %s39
      %p48 = scmp.eq.s32.totalorder %s17, 1
      %p49 = por %p47, %p48
      %p50 = scmp.ne.s32.totalorder %s39, %s40
      %p51 = scmp.eq.s32.totalorder %s17, 0
      %p52 = por %p50, %p51
      %p53 = scmp.ne.s32.totalorder %s39, %s40
      %p54 = scmp.eq.s32.totalorder %s18, 1
      %p55 = por %p53, %p54
      %p57 = scmp.ne.s32.totalorder %s40, %s56
      %p58 = scmp.eq.s32.totalorder %s18, 0
      %p59 = por %p57, %p58
      %s60 = ssub.s32 %s20, %s27
      %p61 = scmp.eq.s32.totalorder %s60, 0
      %s63 = sadd.s32 %s62, 1
      %s64 = scalar_select %p61, %s62, %s63
      %p67 = pneg %p61
      %p68 = scmp.eq.s32.totalorder %s12, 1
      %p69 = por %p67, %p68
      %p70 = scmp.ne.s32.totalorder %s62, %s65
      %p71 = scmp.eq.s32.totalorder %s12, 0
      %p72 = por %p70, %p71
      %p73 = scmp.ne.s32.totalorder %s62, %s65
      %p74 = scmp.eq.s32.totalorder %s17, 1
      %p75 = por %p73, %p74
      %p76 = scmp.ne.s32.totalorder %s65, %s66
      %p77 = scmp.eq.s32.totalorder %s17, 0
      %p78 = por %p76, %p77
      %p79 = scmp.ne.s32.totalorder %s65, %s66
      %p80 = scmp.eq.s32.totalorder %s18, 1
      %p81 = por %p79, %p80
      %p83 = scmp.ne.s32.totalorder %s66, %s82
      %p84 = scmp.eq.s32.totalorder %s18, 0
      %p85 = por %p83, %p84
      %s87 = sadd.s32 %s86, 1
      %p90 = scmp.eq.s32.totalorder %s12, 1
      %p91 = scmp.ne.s32.totalorder %s86, %s88
      %p92 = scmp.eq.s32.totalorder %s12, 0
      %p93 = por %p91, %p92
      %p94 = scmp.ne.s32.totalorder %s86, %s88
      %p95 = scmp.eq.s32.totalorder %s17, 1
      %p96 = por %p94, %p95
      %p97 = scmp.ne.s32.totalorder %s88, %s89
      %p98 = scmp.eq.s32.totalorder %s17, 0
      %p99 = por %p97, %p98
      %p100 = scmp.ne.s32.totalorder %s88, %s89
      %p101 = scmp.eq.s32.totalorder %s18, 1
      %p102 = por %p100, %p101
      %p104 = scmp.ne.s32.totalorder %s89, %s103
      %p105 = scmp.eq.s32.totalorder %s18, 0
      %p106 = por %p104, %p105
      %s107 = ssub.s32 %s19, %s31
      %p108 = scmp.eq.s32.totalorder %s107, 0
      %s110 = sadd.s32 %s109, 1
      %s111 = scalar_select %p108, %s109, %s110
      %p114 = pneg %p108
      %p115 = scmp.eq.s32.totalorder %s12, 1
      %p116 = por %p114, %p115
      %p117 = scmp.ne.s32.totalorder %s109, %s112
      %p118 = scmp.eq.s32.totalorder %s12, 0
      %p119 = por %p117, %p118
      %p120 = scmp.ne.s32.totalorder %s109, %s112
      %p121 = scmp.eq.s32.totalorder %s17, 1
      %p122 = por %p120, %p121
      %p123 = scmp.ne.s32.totalorder %s112, %s113
      %p124 = scmp.eq.s32.totalorder %s17, 0
      %p125 = por %p123, %p124
      %p126 = scmp.ne.s32.totalorder %s112, %s113
      %p127 = scmp.eq.s32.totalorder %s18, 1
      %p128 = por %p126, %p127
      %p130 = scmp.ne.s32.totalorder %s113, %s129
      %p131 = scmp.eq.s32.totalorder %s18, 0
      %p132 = por %p130, %p131
      %p133 = scmp.le.s32.totalorder 1, %s12
      %p134 = scmp.lt.s32.totalorder %s12, 3
      %p135 = pnand %p133, %p134
      %p136 = pneg %p135
      // Predicated region
      $region9: #{tpu_custom_call.1} parent=5 // pred_check
        _
      $region10: #{tpu_custom_call.1} parent=5 // pred_check_branch
        %138 = sbr.rel (%p135) target = $region12
      $region11: #{tpu_custom_call.1} parent=5 // pred_region
        %s139 = ssub.s32 %s12, 1
        // Predicated region
        $region13: #{tpu_custom_call.1} parent=11 // pred_check
          %p140 = pneg %p78
        $region14: #{tpu_custom_call.1} parent=11 // pred_check_branch
          %142 = sbr.rel (%p140) target = $region16
        $region15: #{tpu_custom_call.1} parent=11 // pred_region
          %s143 = smul.u32 3, %s22
          %p144 = scmp.lt.s32.totalorder %s143, 2
          %s145 = scalar_select %p144, %s143, 2
          %s146 = smul.addr %s145, 4
          %s147 = scalar_lea.vmem %s1, %s146
          %s148 = smul.u32 3, %s22
        $region16: #{tpu_custom_call.1} parent=11 // pred_fallthru
          _
        // Predicated region
        $region17: #{tpu_custom_call.1} parent=11 // pred_check
          %p149 = pneg %p99
        $region18: #{tpu_custom_call.1} parent=11 // pred_check_branch
          %151 = sbr.rel (%p149) target = $region20
        $region19: #{tpu_custom_call.1} parent=11 // pred_region
          _
        $region20: #{tpu_custom_call.1} parent=11 // pred_fallthru
          _
      $region12: #{tpu_custom_call.1} parent=5 // pred_fallthru
        _
      %p152 = scmp.lt.s32.totalorder %s12, 2
      // Predicated region
      $region21: #{tpu_custom_call.1} parent=5 // pred_check
        %p153 = pneg %p152
      $region22: #{tpu_custom_call.1} parent=5 // pred_check_branch
        %155 = sbr.rel (%p153) target = $region24
      $region23: #{tpu_custom_call.1} parent=5 // pred_region
        // Predicated region
        $region25: #{tpu_custom_call.1} parent=23 // pred_check
          %p156 = pneg %p46
        $region26: #{tpu_custom_call.1} parent=23 // pred_check_branch
          %158 = sbr.rel (%p156) target = $region28
        $region27: #{tpu_custom_call.1} parent=23 // pred_region
          %s159 = smul.u32 32, %s19
          %p160 = scmp.lt.s32.totalorder %s159, 63
          %s161 = scalar_select %p160, %s159, 63
          %p162 = scmp.lt.s32.totalorder %s20, 0
          %s163 = scalar_select %p162, %s20, 0
          %s164 = sadd.s32 %s163, %s161
          %s165 = smul.addr %s164, 4
          %s166 = scalar_lea.vmem %s0, %s165
          %s167 = smul.u32 32, %s19
        $region28: #{tpu_custom_call.1} parent=23 // pred_fallthru
          _
      $region24: #{tpu_custom_call.1} parent=5 // pred_fallthru
        _
      %p168 = scmp.le.s32.totalorder 1, %s12
      %p169 = scmp.lt.s32.totalorder %s12, 3
      %p170 = pnand %p168, %p169
      %p171 = pneg %p170
      // Predicated region
      $region29: #{tpu_custom_call.1} parent=5 // pred_check
        _
      $region30: #{tpu_custom_call.1} parent=5 // pred_check_branch
        %173 = sbr.rel (%p170) target = $region32
      $region31: #{tpu_custom_call.1} parent=5 // pred_region
        %s174 = ssub.s32 %s12, 1
        %s175 = smul.u32 32, %s21
        %p176 = scmp.lt.s32.totalorder %s175, 63
        %s177 = scalar_select %p176, %s175, 63
        %p178 = scmp.lt.s32.totalorder %s22, 0
        %s179 = scalar_select %p178, %s22, 0
        %s180 = sadd.s32 %s179, %s177
        %s181 = smul.addr %s180, 4
        %s182 = scalar_lea.vmem %s0, %s181
        %p183 = pneg %p52
        %p184 = pneg %p49
        %s185 = smul.u32 3, %s22
        %p186 = scmp.lt.s32.totalorder %s185, 2
        %s187 = scalar_select %p186, %s185, 2
        %s188 = smul.addr %s187, 4
        %s189 = scalar_lea.vmem %s1, %s188
        %p190 = pneg %p78
        %p191 = pneg %p75
        %p192 = pneg %p99
        %p193 = pneg %p96
        %p194 = pneg %p125
        %p195 = pneg %p122
        %s196 = sand.u32 %s112, 1
        %s197 = scalar_lea.sflag [#allocation4], %s196
        %s198 = sand.u32 %s112, 1
        %s199 = smul.addr %s198, 256
        %s200 = scalar_lea.vmem [#allocation3], %s199
        %s201 = smul.u32 32, %s21
        %p202 = scmp.lt.s32.totalorder %s201, 63
        %s203 = scalar_select %p202, %s201, 63
        %p204 = scmp.lt.s32.totalorder %s22, 0
        %s205 = scalar_select %p204, %s22, 0
        %s206 = sadd.s32 %s205, %s203
        %s207 = smul.addr %s206, 4
        %s208 = scalar_lea.vmem %s0, %s207
        %s209 = smul.u32 32, %s21
        %s210 = smul.u32 3, %s22
        %p211 = scmp.lt.s32.totalorder %s210, 2
        %s212 = scalar_select %p211, %s210, 2
        %s213 = smul.addr %s212, 4
        %s214 = scalar_lea.vmem %s1, %s213
        %s215 = smul.u32 3, %s22
        %s216 = smul.u32 32, %s21
        %p218 = scmp.eq.s32.totalorder %s22, 0
        // Predicated region
        $region33: #{tpu_custom_call.1} parent=31 // pred_check
          %p219 = pneg %p218
        $region34: #{tpu_custom_call.1} parent=31 // pred_check_branch
          %221 = sbr.rel (%p219) target = $region36
        $region35: #{tpu_custom_call.1} parent=31 // pred_region
          %222 = vst [vmem:[#allocation2] sm:$0xff] 0.0
          %223 = vst [vmem:[#allocation2 + $0x8] sm:$0xff] 0.0
          %224 = vst [vmem:[#allocation2 + $0x10] sm:$0xff] 0.0
          %225 = vst [vmem:[#allocation2 + $0x18] sm:$0xff] 0.0
          %226 = vst [vmem:[#allocation2 + $0x20] sm:$0xff] 0.0
          %227 = vst [vmem:[#allocation2 + $0x28] sm:$0xff] 0.0
          %228 = vst [vmem:[#allocation2 + $0x30] sm:$0xff] 0.0
          %229 = vst [vmem:[#allocation2 + $0x38] sm:$0xff] 0.0
          %230 = vst [vmem:[#allocation2 + $0x40] sm:$0xff] 0.0
          %231 = vst [vmem:[#allocation2 + $0x48] sm:$0xff] 0.0
          %232 = vst [vmem:[#allocation2 + $0x50] sm:$0xff] 0.0
          %233 = vst [vmem:[#allocation2 + $0x58] sm:$0xff] 0.0
          %234 = vst [vmem:[#allocation2 + $0x60] sm:$0xff] 0.0
          %235 = vst [vmem:[#allocation2 + $0x68] sm:$0xff] 0.0
          %236 = vst [vmem:[#allocation2 + $0x70] sm:$0xff] 0.0
          %237 = vst [vmem:[#allocation2 + $0x78] sm:$0xff] 0.0
          %238 = vst [vmem:[#allocation2 + $0x80] sm:$0xff] 0.0
          %239 = vst [vmem:[#allocation2 + $0x88] sm:$0xff] 0.0
          %240 = vst [vmem:[#allocation2 + $0x90] sm:$0xff] 0.0
          %241 = vst [vmem:[#allocation2 + $0x98] sm:$0xff] 0.0
          %242 = vst [vmem:[#allocation2 + $0xa0] sm:$0xff] 0.0
          %243 = vst [vmem:[#allocation2 + $0xa8] sm:$0xff] 0.0
          %244 = vst [vmem:[#allocation2 + $0xb0] sm:$0xff] 0.0
          %245 = vst [vmem:[#allocation2 + $0xb8] sm:$0xff] 0.0
          %246 = vst [vmem:[#allocation2 + $0xc0] sm:$0xff] 0.0
          %247 = vst [vmem:[#allocation2 + $0xc8] sm:$0xff] 0.0
          %248 = vst [vmem:[#allocation2 + $0xd0] sm:$0xff] 0.0
          %249 = vst [vmem:[#allocation2 + $0xd8] sm:$0xff] 0.0
          %250 = vst [vmem:[#allocation2 + $0xe0] sm:$0xff] 0.0
          %251 = vst [vmem:[#allocation2 + $0xe8] sm:$0xff] 0.0
          %252 = vst [vmem:[#allocation2 + $0xf0] sm:$0xff] 0.0
          %253 = vst [vmem:[#allocation2 + $0xf8] sm:$0xff] 0.0
        $region36: #{tpu_custom_call.1} parent=31 // pred_fallthru
          _
        %v254 = vld [vmem:[#allocation2] sm:$0xff]
        %v255 = vld [vmem:[#allocation2 + $0x8] sm:$0xff]
        %v256 = vld [vmem:[#allocation2 + $0x10] sm:$0xff]
        %v257 = vld [vmem:[#allocation2 + $0x18] sm:$0xff]
        %v258 = vld [vmem:[#allocation2 + $0x20] sm:$0xff]
        %v259 = vld [vmem:[#allocation2 + $0x28] sm:$0xff]
        %v260 = vld [vmem:[#allocation2 + $0x30] sm:$0xff]
        %v261 = vld [vmem:[#allocation2 + $0x38] sm:$0xff]
        %v262 = vld [vmem:[#allocation2 + $0x40] sm:$0xff]
        %v263 = vld [vmem:[#allocation2 + $0x48] sm:$0xff]
        %v264 = vld [vmem:[#allocation2 + $0x50] sm:$0xff]
        %v265 = vld [vmem:[#allocation2 + $0x58] sm:$0xff]
        %v266 = vld [vmem:[#allocation2 + $0x60] sm:$0xff]
        %v267 = vld [vmem:[#allocation2 + $0x68] sm:$0xff]
        %v268 = vld [vmem:[#allocation2 + $0x70] sm:$0xff]
        %v269 = vld [vmem:[#allocation2 + $0x78] sm:$0xff]
        %v270 = vld [vmem:[#allocation2 + $0x80] sm:$0xff]
        %v271 = vld [vmem:[#allocation2 + $0x88] sm:$0xff]
        %v272 = vld [vmem:[#allocation2 + $0x90] sm:$0xff]
        %v273 = vld [vmem:[#allocation2 + $0x98] sm:$0xff]
        %v274 = vld [vmem:[#allocation2 + $0xa0] sm:$0xff]
        %v275 = vld [vmem:[#allocation2 + $0xa8] sm:$0xff]
        %v276 = vld [vmem:[#allocation2 + $0xb0] sm:$0xff]
        %v277 = vld [vmem:[#allocation2 + $0xb8] sm:$0xff]
        %v278 = vld [vmem:[#allocation2 + $0xc0] sm:$0xff]
        %v279 = vld [vmem:[#allocation2 + $0xc8] sm:$0xff]
        %v280 = vld [vmem:[#allocation2 + $0xd0] sm:$0xff]
        %v281 = vld [vmem:[#allocation2 + $0xd8] sm:$0xff]
        %v282 = vld [vmem:[#allocation2 + $0xe0] sm:$0xff]
        %v283 = vld [vmem:[#allocation2 + $0xe8] sm:$0xff]
        %v284 = vld [vmem:[#allocation2 + $0xf0] sm:$0xff]
        %v285 = vld [vmem:[#allocation2 + $0xf8] sm:$0xff]
        %v286 = vld [vmem:[%s208] sm:$0xf]
        %v287 = vld [vmem:[%s208 + $0x4] sm:$0xf]
        %v288 = vld [vmem:[%s208 + $0x8] sm:$0xf]
        %v289 = vld [vmem:[%s208 + $0xc] sm:$0xf]
        %v290 = vld [vmem:[%s208 + $0x10] sm:$0xf]
        %v291 = vld [vmem:[%s208 + $0x14] sm:$0xf]
        %v292 = vld [vmem:[%s208 + $0x18] sm:$0xf]
        %v293 = vld [vmem:[%s208 + $0x1c] sm:$0xf]
        %v294 = vld [vmem:[%s208 + $0x20] sm:$0xf]
        %v295 = vld [vmem:[%s208 + $0x24] sm:$0xf]
        %v296 = vld [vmem:[%s208 + $0x28] sm:$0xf]
        %v297 = vld [vmem:[%s208 + $0x2c] sm:$0xf]
        %v298 = vld [vmem:[%s208 + $0x30] sm:$0xf]
        %v299 = vld [vmem:[%s208 + $0x34] sm:$0xf]
        %v300 = vld [vmem:[%s208 + $0x38] sm:$0xf]
        %v301 = vld [vmem:[%s208 + $0x3c] sm:$0xf]
        %v302 = vld [vmem:[%s208 + $0x40] sm:$0xf]
        %v303 = vld [vmem:[%s208 + $0x44] sm:$0xf]
        %v304 = vld [vmem:[%s208 + $0x48] sm:$0xf]
        %v305 = vld [vmem:[%s208 + $0x4c] sm:$0xf]
        %v306 = vld [vmem:[%s208 + $0x50] sm:$0xf]
        %v307 = vld [vmem:[%s208 + $0x54] sm:$0xf]
        %v308 = vld [vmem:[%s208 + $0x58] sm:$0xf]
        %v309 = vld [vmem:[%s208 + $0x5c] sm:$0xf]
        %v310 = vld [vmem:[%s208 + $0x60] sm:$0xf]
        %v311 = vld [vmem:[%s208 + $0x64] sm:$0xf]
        %v312 = vld [vmem:[%s208 + $0x68] sm:$0xf]
        %v313 = vld [vmem:[%s208 + $0x6c] sm:$0xf]
        %v314 = vld [vmem:[%s208 + $0x70] sm:$0xf]
        %v315 = vld [vmem:[%s208 + $0x74] sm:$0xf]
        %v316 = vld [vmem:[%s208 + $0x78] sm:$0xf]
        %v317 = vld [vmem:[%s208 + $0x7c] sm:$0xf]
        %v318 = vld [vmem:[%s214] sm:$0xf]
        %v319 = vld [vmem:[%s214 + $0x4] sm:$0xf]
        %v320 = vld [vmem:[%s214 + $0x8] sm:$0x3]
        %v353 = vunpack.c.l.b16 %v286
        %v354 = vunpack.c.l.b16 %v287
        %v355 = vunpack.c.l.b16 %v288
        %v356 = vunpack.c.l.b16 %v289
        %v357 = vunpack.c.l.b16 %v290
        %v358 = vunpack.c.l.b16 %v291
        %v359 = vunpack.c.l.b16 %v292
        %v360 = vunpack.c.l.b16 %v293
        %v361 = vunpack.c.l.b16 %v294
        %v362 = vunpack.c.l.b16 %v295
        %v363 = vunpack.c.l.b16 %v296
        %v364 = vunpack.c.l.b16 %v297
        %v365 = vunpack.c.l.b16 %v298
        %v366 = vunpack.c.l.b16 %v299
        %v367 = vunpack.c.l.b16 %v300
        %v368 = vunpack.c.l.b16 %v301
        %v369 = vunpack.c.l.b16 %v302
        %v370 = vunpack.c.l.b16 %v303
        %v371 = vunpack.c.l.b16 %v304
        %v372 = vunpack.c.l.b16 %v305
        %v373 = vunpack.c.l.b16 %v306
        %v374 = vunpack.c.l.b16 %v307
        %v375 = vunpack.c.l.b16 %v308
        %v376 = vunpack.c.l.b16 %v309
        %v377 = vunpack.c.l.b16 %v310
        %v378 = vunpack.c.l.b16 %v311
        %v379 = vunpack.c.l.b16 %v312
        %v380 = vunpack.c.l.b16 %v313
        %v381 = vunpack.c.l.b16 %v314
        %v382 = vunpack.c.l.b16 %v315
        %v383 = vunpack.c.l.b16 %v316
        %v384 = vunpack.c.l.b16 %v317
        %v385 = vpack.c.b16 %v354, %v353
        %v386 = vpack.c.b16 %v356, %v355
        %v387 = vpack.c.b16 %v358, %v357
        %v388 = vpack.c.b16 %v360, %v359
        %v389 = vpack.c.b16 %v362, %v361
        %v390 = vpack.c.b16 %v364, %v363
        %v391 = vpack.c.b16 %v366, %v365
        %v392 = vpack.c.b16 %v368, %v367
        %v393 = vpack.c.b16 %v370, %v369
        %v394 = vpack.c.b16 %v372, %v371
        %v395 = vpack.c.b16 %v374, %v373
        %v396 = vpack.c.b16 %v376, %v375
        %v397 = vpack.c.b16 %v378, %v377
        %v398 = vpack.c.b16 %v380, %v379
        %v399 = vpack.c.b16 %v382, %v381
        %v400 = vpack.c.b16 %v384, %v383
        %v404 = vunpack.c.l.b16 %v318
        %v405 = vunpack.c.l.b16 %v319
        %v406 = vunpack.c.l.b16 %v320
        %v407 = vpack.c.b16 %v405, %v404
        %v408 = vpack.c.b16 %v406, %v406
        %vm410 = vcmask 162816
        %v412 = vsel %vm410, %v385, 0
        %v415 = vsel %vm410, %v386, 0
        %v418 = vsel %vm410, %v387, 0
        %v421 = vsel %vm410, %v388, 0
        %v424 = vsel %vm410, %v389, 0
        %v427 = vsel %vm410, %v390, 0
        %v430 = vsel %vm410, %v391, 0
        %v433 = vsel %vm410, %v392, 0
        %v436 = vsel %vm410, %v393, 0
        %v439 = vsel %vm410, %v394, 0
        %v442 = vsel %vm410, %v395, 0
        %v445 = vsel %vm410, %v396, 0
        %v448 = vsel %vm410, %v397, 0
        %v451 = vsel %vm410, %v398, 0
        %v454 = vsel %vm410, %v399, 0
        %v457 = vsel %vm410, %v400, 0
        %vm459 = vcmask 1041408
        %v461 = vsel %vm459, %v408, 0
        %463 = vmatprep.subr.bf16.mxu0 0
        %464 = vmatpush1.bf16.msra.mxu0 %v407
        %465 = vmatprep.subr.bf16.mxu0 0
        %466 = vmatpush1.bf16.msra.mxu0 %v461
        %467 = vmatprep.subr.bf16.mxu0 0
        %468 = vmatpush1.bf16.msra.mxu0 0
        %469 = vmatprep.subr.bf16.mxu0 0
        %470 = vmatpush1.bf16.msra.mxu0 0
        %471 = vmatprep.subr.bf16.mxu0 0
        %472 = vmatpush1.bf16.msra.mxu0 0
        %473 = vmatprep.subr.bf16.mxu0 0
        %474 = vmatpush1.bf16.msra.mxu0 0
        %475 = vmatprep.subr.bf16.mxu0 0
        %476 = vmatpush1.bf16.msra.mxu0 0
        %477 = vmatprep.subr.bf16.mxu0 0
        %478 = vmatpush1.bf16.msra.mxu0 0
        %479 = vmatprep.subr.bf16.mxu0 0
        %480 = vmatpush1.bf16.msra.mxu0 0
        %481 = vmatprep.subr.bf16.mxu0 0
        %482 = vmatpush1.bf16.msra.mxu0 0
        %483 = vmatprep.subr.bf16.mxu0 0
        %484 = vmatpush1.bf16.msra.mxu0 0
        %485 = vmatprep.subr.bf16.mxu0 0
        %486 = vmatpush1.bf16.msra.mxu0 0
        %487 = vmatprep.subr.bf16.mxu0 0
        %488 = vmatpush1.bf16.msra.mxu0 0
        %489 = vmatprep.subr.bf16.mxu0 0
        %490 = vmatpush1.bf16.msra.mxu0 0
        %491 = vmatprep.subr.bf16.mxu0 0
        %492 = vmatpush1.bf16.msra.mxu0 0
        %493 = vmatprep.subr.bf16.mxu0 0
        %494 = vmatpush1.bf16.msra.mxu0 0
        %495 = vmatprep.mubr.bf16.mxu0 0
        %496 = vmatmul.mubr.bf16.gmra.mrb[0].mxu0 %v412
        %v497 = vpop.f32.mrb[0].mxu0
        %v498 = vadd.f32 0.0, %v497
        %v499 = vpop.f32.mrb[0].mxu0
        %v500 = vpop.f32.mrb[0].mxu0
        %v501 = vadd.f32 0.0, %v500
        %v502 = vpop.f32.mrb[0].mxu0
        %503 = vmatprep.mubr.bf16.mxu0 0
        %504 = vmatmul.mubr.bf16.gmra.mrb[0].mxu0 %v415
        %v505 = vpop.f32.mrb[0].mxu0
        %v506 = vadd.f32 0.0, %v505
        %v507 = vpop.f32.mrb[0].mxu0
        %v508 = vpop.f32.mrb[0].mxu0
        %v509 = vadd.f32 0.0, %v508
        %v510 = vpop.f32.mrb[0].mxu0
        %511 = vmatprep.mubr.bf16.mxu0 0
        %512 = vmatmul.mubr.bf16.gmra.mrb[0].mxu0 %v418
        %v513 = vpop.f32.mrb[0].mxu0
        %v514 = vadd.f32 0.0, %v513
        %v515 = vpop.f32.mrb[0].mxu0
        %v516 = vpop.f32.mrb[0].mxu0
        %v517 = vadd.f32 0.0, %v516
        %v518 = vpop.f32.mrb[0].mxu0
        %519 = vmatprep.mubr.bf16.mxu0 0
        %520 = vmatmul.mubr.bf16.gmra.mrb[0].mxu0 %v421
        %v521 = vpop.f32.mrb[0].mxu0
        %v522 = vadd.f32 0.0, %v521
        %v523 = vpop.f32.mrb[0].mxu0
        %v524 = vpop.f32.mrb[0].mxu0
        %v525 = vadd.f32 0.0, %v524
        %v526 = vpop.f32.mrb[0].mxu0
        %527 = vmatprep.mubr.bf16.mxu0 0
        %528 = vmatmul.mubr.bf16.gmra.mrb[0].mxu0 %v424
        %v529 = vpop.f32.mrb[0].mxu0
        %v530 = vadd.f32 0.0, %v529
        %v531 = vpop.f32.mrb[0].mxu0
        %v532 = vpop.f32.mrb[0].mxu0
        %v533 = vadd.f32 0.0, %v532
        %v534 = vpop.f32.mrb[0].mxu0
        %535 = vmatprep.mubr.bf16.mxu0 0
        %536 = vmatmul.mubr.bf16.gmra.mrb[0].mxu0 %v427
        %v537 = vpop.f32.mrb[0].mxu0
        %v538 = vadd.f32 0.0, %v537
        %v539 = vpop.f32.mrb[0].mxu0
        %v540 = vpop.f32.mrb[0].mxu0
        %v541 = vadd.f32 0.0, %v540
        %v542 = vpop.f32.mrb[0].mxu0
        %543 = vmatprep.mubr.bf16.mxu0 0
        %544 = vmatmul.mubr.bf16.gmra.mrb[0].mxu0 %v430
        %v545 = vpop.f32.mrb[0].mxu0
        %v546 = vadd.f32 0.0, %v545
        %v547 = vpop.f32.mrb[0].mxu0
        %v548 = vpop.f32.mrb[0].mxu0
        %v549 = vadd.f32 0.0, %v548
        %v550 = vpop.f32.mrb[0].mxu0
        %551 = vmatprep.mubr.bf16.mxu0 0
        %552 = vmatmul.mubr.bf16.gmra.mrb[0].mxu0 %v433
        %v553 = vpop.f32.mrb[0].mxu0
        %v554 = vadd.f32 0.0, %v553
        %v555 = vpop.f32.mrb[0].mxu0
        %v556 = vpop.f32.mrb[0].mxu0
        %v557 = vadd.f32 0.0, %v556
        %v558 = vpop.f32.mrb[0].mxu0
        %559 = vmatprep.mubr.bf16.mxu0 0
        %560 = vmatmul.mubr.bf16.gmra.mrb[0].mxu0 %v436
        %v561 = vpop.f32.mrb[0].mxu0
        %v562 = vadd.f32 0.0, %v561
        %v563 = vpop.f32.mrb[0].mxu0
        %v564 = vpop.f32.mrb[0].mxu0
        %v565 = vadd.f32 0.0, %v564
        %v566 = vpop.f32.mrb[0].mxu0
        %567 = vmatprep.mubr.bf16.mxu0 0
        %568 = vmatmul.mubr.bf16.gmra.mrb[0].mxu0 %v439
        %v569 = vpop.f32.mrb[0].mxu0
        %v570 = vadd.f32 0.0, %v569
        %v571 = vpop.f32.mrb[0].mxu0
        %v572 = vpop.f32.mrb[0].mxu0
        %v573 = vadd.f32 0.0, %v572
        %v574 = vpop.f32.mrb[0].mxu0
        %575 = vmatprep.mubr.bf16.mxu0 0
        %576 = vmatmul.mubr.bf16.gmra.mrb[0].mxu0 %v442
        %v577 = vpop.f32.mrb[0].mxu0
        %v578 = vadd.f32 0.0, %v577
        %v579 = vpop.f32.mrb[0].mxu0
        %v580 = vpop.f32.mrb[0].mxu0
        %v581 = vadd.f32 0.0, %v580
        %v582 = vpop.f32.mrb[0].mxu0
        %583 = vmatprep.mubr.bf16.mxu0 0
        %584 = vmatmul.mubr.bf16.gmra.mrb[0].mxu0 %v445
        %v585 = vpop.f32.mrb[0].mxu0
        %v586 = vadd.f32 0.0, %v585
        %v587 = vpop.f32.mrb[0].mxu0
        %v588 = vpop.f32.mrb[0].mxu0
        %v589 = vadd.f32 0.0, %v588
        %v590 = vpop.f32.mrb[0].mxu0
        %591 = vmatprep.mubr.bf16.mxu0 0
        %592 = vmatmul.mubr.bf16.gmra.mrb[0].mxu0 %v448
        %v593 = vpop.f32.mrb[0].mxu0
        %v594 = vadd.f32 0.0, %v593
        %v595 = vpop.f32.mrb[0].mxu0
        %v596 = vpop.f32.mrb[0].mxu0
        %v597 = vadd.f32 0.0, %v596
        %v598 = vpop.f32.mrb[0].mxu0
        %599 = vmatprep.mubr.bf16.mxu0 0
        %600 = vmatmul.mubr.bf16.gmra.mrb[0].mxu0 %v451
        %v601 = vpop.f32.mrb[0].mxu0
        %v602 = vadd.f32 0.0, %v601
        %v603 = vpop.f32.mrb[0].mxu0
        %v604 = vpop.f32.mrb[0].mxu0
        %v605 = vadd.f32 0.0, %v604
        %v606 = vpop.f32.mrb[0].mxu0
        %607 = vmatprep.mubr.bf16.mxu0 0
        %608 = vmatmul.mubr.bf16.gmra.mrb[0].mxu0 %v454
        %v609 = vpop.f32.mrb[0].mxu0
        %v610 = vadd.f32 0.0, %v609
        %v611 = vpop.f32.mrb[0].mxu0
        %v612 = vpop.f32.mrb[0].mxu0
        %v613 = vadd.f32 0.0, %v612
        %v614 = vpop.f32.mrb[0].mxu0
        %615 = vmatprep.mubr.bf16.mxu0 0
        %616 = vmatmul.mubr.bf16.gmra.mrb[0].mxu0 %v457
        %v617 = vpop.f32.mrb[0].mxu0
        %v618 = vadd.f32 0.0, %v617
        %v619 = vpop.f32.mrb[0].mxu0
        %v620 = vpop.f32.mrb[0].mxu0
        %v621 = vadd.f32 0.0, %v620
        %v622 = vpop.f32.mrb[0].mxu0
        %623 = vdwg.mxu0
        %v624 = vadd.f32 %v254, %v498
        %v625 = vadd.f32 %v255, %v501
        %v626 = vadd.f32 %v256, %v506
        %v627 = vadd.f32 %v257, %v509
        %v628 = vadd.f32 %v258, %v514
        %v629 = vadd.f32 %v259, %v517
        %v630 = vadd.f32 %v260, %v522
        %v631 = vadd.f32 %v261, %v525
        %v632 = vadd.f32 %v262, %v530
        %v633 = vadd.f32 %v263, %v533
        %v634 = vadd.f32 %v264, %v538
        %v635 = vadd.f32 %v265, %v541
        %v636 = vadd.f32 %v266, %v546
        %v637 = vadd.f32 %v267, %v549
        %v638 = vadd.f32 %v268, %v554
        %v639 = vadd.f32 %v269, %v557
        %v640 = vadd.f32 %v270, %v562
        %v641 = vadd.f32 %v271, %v565
        %v642 = vadd.f32 %v272, %v570
        %v643 = vadd.f32 %v273, %v573
        %v644 = vadd.f32 %v274, %v578
        %v645 = vadd.f32 %v275, %v581
        %v646 = vadd.f32 %v276, %v586
        %v647 = vadd.f32 %v277, %v589
        %v648 = vadd.f32 %v278, %v594
        %v649 = vadd.f32 %v279, %v597
        %v650 = vadd.f32 %v280, %v602
        %v651 = vadd.f32 %v281, %v605
        %v652 = vadd.f32 %v282, %v610
        %v653 = vadd.f32 %v283, %v613
        %v654 = vadd.f32 %v284, %v618
        %v655 = vadd.f32 %v285, %v621
        %656 = vst [vmem:[#allocation2] sm:$0xff] %v624
        %657 = vst [vmem:[#allocation2 + $0x8] sm:$0xff] %v625
        %658 = vst [vmem:[#allocation2 + $0x10] sm:$0xff] %v626
        %659 = vst [vmem:[#allocation2 + $0x18] sm:$0xff] %v627
        %660 = vst [vmem:[#allocation2 + $0x20] sm:$0xff] %v628
        %661 = vst [vmem:[#allocation2 + $0x28] sm:$0xff] %v629
        %662 = vst [vmem:[#allocation2 + $0x30] sm:$0xff] %v630
        %663 = vst [vmem:[#allocation2 + $0x38] sm:$0xff] %v631
        %664 = vst [vmem:[#allocation2 + $0x40] sm:$0xff] %v632
        %665 = vst [vmem:[#allocation2 + $0x48] sm:$0xff] %v633
        %666 = vst [vmem:[#allocation2 + $0x50] sm:$0xff] %v634
        %667 = vst [vmem:[#allocation2 + $0x58] sm:$0xff] %v635
        %668 = vst [vmem:[#allocation2 + $0x60] sm:$0xff] %v636
        %669 = vst [vmem:[#allocation2 + $0x68] sm:$0xff] %v637
        %670 = vst [vmem:[#allocation2 + $0x70] sm:$0xff] %v638
        %671 = vst [vmem:[#allocation2 + $0x78] sm:$0xff] %v639
        %672 = vst [vmem:[#allocation2 + $0x80] sm:$0xff] %v640
        %673 = vst [vmem:[#allocation2 + $0x88] sm:$0xff] %v641
        %674 = vst [vmem:[#allocation2 + $0x90] sm:$0xff] %v642
        %675 = vst [vmem:[#allocation2 + $0x98] sm:$0xff] %v643
        %676 = vst [vmem:[#allocation2 + $0xa0] sm:$0xff] %v644
        %677 = vst [vmem:[#allocation2 + $0xa8] sm:$0xff] %v645
        %678 = vst [vmem:[#allocation2 + $0xb0] sm:$0xff] %v646
        %679 = vst [vmem:[#allocation2 + $0xb8] sm:$0xff] %v647
        %680 = vst [vmem:[#allocation2 + $0xc0] sm:$0xff] %v648
        %681 = vst [vmem:[#allocation2 + $0xc8] sm:$0xff] %v649
        %682 = vst [vmem:[#allocation2 + $0xd0] sm:$0xff] %v650
        %683 = vst [vmem:[#allocation2 + $0xd8] sm:$0xff] %v651
        %684 = vst [vmem:[#allocation2 + $0xe0] sm:$0xff] %v652
        %685 = vst [vmem:[#allocation2 + $0xe8] sm:$0xff] %v653
        %686 = vst [vmem:[#allocation2 + $0xf0] sm:$0xff] %v654
        %687 = vst [vmem:[#allocation2 + $0xf8] sm:$0xff] %v655
        // Predicated region
        $region37: #{tpu_custom_call.1} parent=31 // pred_check
          %p688 = pneg %p218
        $region38: #{tpu_custom_call.1} parent=31 // pred_check_branch
          %690 = sbr.rel (%p688) target = $region40
        $region39: #{tpu_custom_call.1} parent=31 // pred_region
          %v691 = vld [vmem:[#allocation2] sm:$0xff]
          %v692 = vld [vmem:[#allocation2 + $0x8] sm:$0xff]
          %v693 = vld [vmem:[#allocation2 + $0x10] sm:$0xff]
          %v694 = vld [vmem:[#allocation2 + $0x18] sm:$0xff]
          %v695 = vld [vmem:[#allocation2 + $0x20] sm:$0xff]
          %v696 = vld [vmem:[#allocation2 + $0x28] sm:$0xff]
          %v697 = vld [vmem:[#allocation2 + $0x30] sm:$0xff]
          %v698 = vld [vmem:[#allocation2 + $0x38] sm:$0xff]
          %v699 = vld [vmem:[#allocation2 + $0x40] sm:$0xff]
          %v700 = vld [vmem:[#allocation2 + $0x48] sm:$0xff]
          %v701 = vld [vmem:[#allocation2 + $0x50] sm:$0xff]
          %v702 = vld [vmem:[#allocation2 + $0x58] sm:$0xff]
          %v703 = vld [vmem:[#allocation2 + $0x60] sm:$0xff]
          %v704 = vld [vmem:[#allocation2 + $0x68] sm:$0xff]
          %v705 = vld [vmem:[#allocation2 + $0x70] sm:$0xff]
          %v706 = vld [vmem:[#allocation2 + $0x78] sm:$0xff]
          %v707 = vld [vmem:[#allocation2 + $0x80] sm:$0xff]
          %v708 = vld [vmem:[#allocation2 + $0x88] sm:$0xff]
          %v709 = vld [vmem:[#allocation2 + $0x90] sm:$0xff]
          %v710 = vld [vmem:[#allocation2 + $0x98] sm:$0xff]
          %v711 = vld [vmem:[#allocation2 + $0xa0] sm:$0xff]
          %v712 = vld [vmem:[#allocation2 + $0xa8] sm:$0xff]
          %v713 = vld [vmem:[#allocation2 + $0xb0] sm:$0xff]
          %v714 = vld [vmem:[#allocation2 + $0xb8] sm:$0xff]
          %v715 = vld [vmem:[#allocation2 + $0xc0] sm:$0xff]
          %v716 = vld [vmem:[#allocation2 + $0xc8] sm:$0xff]
          %v717 = vld [vmem:[#allocation2 + $0xd0] sm:$0xff]
          %v718 = vld [vmem:[#allocation2 + $0xd8] sm:$0xff]
          %v719 = vld [vmem:[#allocation2 + $0xe0] sm:$0xff]
          %v720 = vld [vmem:[#allocation2 + $0xe8] sm:$0xff]
          %v721 = vld [vmem:[#allocation2 + $0xf0] sm:$0xff]
          %v722 = vld [vmem:[#allocation2 + $0xf8] sm:$0xff]
          %v723 = vld [vmem:[%s2] sm:$0x1]
          %v725 = vlaneseq
          %v726 = vshrl.u32 %v725, 7
          %v727 = vsub.s32 0, %v726
          %v728 = vrot.slane %v723, %v727
          %v730 = vadd.f32 %v691, %v728
          %v731 = vadd.f32 %v692, %v728
          %v732 = vadd.f32 %v693, %v728
          %v733 = vadd.f32 %v694, %v728
          %v734 = vadd.f32 %v695, %v728
          %v735 = vadd.f32 %v696, %v728
          %v736 = vadd.f32 %v697, %v728
          %v737 = vadd.f32 %v698, %v728
          %v738 = vadd.f32 %v699, %v728
          %v739 = vadd.f32 %v700, %v728
          %v740 = vadd.f32 %v701, %v728
          %v741 = vadd.f32 %v702, %v728
          %v742 = vadd.f32 %v703, %v728
          %v743 = vadd.f32 %v704, %v728
          %v744 = vadd.f32 %v705, %v728
          %v745 = vadd.f32 %v706, %v728
          %v746 = vadd.f32 %v707, %v728
          %v747 = vadd.f32 %v708, %v728
          %v748 = vadd.f32 %v709, %v728
          %v749 = vadd.f32 %v710, %v728
          %v750 = vadd.f32 %v711, %v728
          %v751 = vadd.f32 %v712, %v728
          %v752 = vadd.f32 %v713, %v728
          %v753 = vadd.f32 %v714, %v728
          %v754 = vadd.f32 %v715, %v728
          %v755 = vadd.f32 %v716, %v728
          %v756 = vadd.f32 %v717, %v728
          %v757 = vadd.f32 %v718, %v728
          %v758 = vadd.f32 %v719, %v728
          %v759 = vadd.f32 %v720, %v728
          %v760 = vadd.f32 %v721, %v728
          %v761 = vadd.f32 %v722, %v728
          %v762 = vmax.f32 %v730, 0.0
          %v763 = vmax.f32 %v731, 0.0
          %v764 = vmax.f32 %v732, 0.0
          %v765 = vmax.f32 %v733, 0.0
          %v766 = vmax.f32 %v734, 0.0
          %v767 = vmax.f32 %v735, 0.0
          %v768 = vmax.f32 %v736, 0.0
          %v769 = vmax.f32 %v737, 0.0
          %v770 = vmax.f32 %v738, 0.0
          %v771 = vmax.f32 %v739, 0.0
          %v772 = vmax.f32 %v740, 0.0
          %v773 = vmax.f32 %v741, 0.0
          %v774 = vmax.f32 %v742, 0.0
          %v775 = vmax.f32 %v743, 0.0
          %v776 = vmax.f32 %v744, 0.0
          %v777 = vmax.f32 %v745, 0.0
          %v778 = vmax.f32 %v746, 0.0
          %v779 = vmax.f32 %v747, 0.0
          %v780 = vmax.f32 %v748, 0.0
          %v781 = vmax.f32 %v749, 0.0
          %v782 = vmax.f32 %v750, 0.0
          %v783 = vmax.f32 %v751, 0.0
          %v784 = vmax.f32 %v752, 0.0
          %v785 = vmax.f32 %v753, 0.0
          %v786 = vmax.f32 %v754, 0.0
          %v787 = vmax.f32 %v755, 0.0
          %v788 = vmax.f32 %v756, 0.0
          %v789 = vmax.f32 %v757, 0.0
          %v790 = vmax.f32 %v758, 0.0
          %v791 = vmax.f32 %v759, 0.0
          %v792 = vmax.f32 %v760, 0.0
          %v793 = vmax.f32 %v761, 0.0
          %794 = vst [vmem:[%s200] sm:$0xff] %v762
          %795 = vst [vmem:[%s200 + $0x8] sm:$0xff] %v763
          %796 = vst [vmem:[%s200 + $0x10] sm:$0xff] %v764
          %797 = vst [vmem:[%s200 + $0x18] sm:$0xff] %v765
          %798 = vst [vmem:[%s200 + $0x20] sm:$0xff] %v766
          %799 = vst [vmem:[%s200 + $0x28] sm:$0xff] %v767
          %800 = vst [vmem:[%s200 + $0x30] sm:$0xff] %v768
          %801 = vst [vmem:[%s200 + $0x38] sm:$0xff] %v769
          %802 = vst [vmem:[%s200 + $0x40] sm:$0xff] %v770
          %803 = vst [vmem:[%s200 + $0x48] sm:$0xff] %v771
          %804 = vst [vmem:[%s200 + $0x50] sm:$0xff] %v772
          %805 = vst [vmem:[%s200 + $0x58] sm:$0xff] %v773
          %806 = vst [vmem:[%s200 + $0x60] sm:$0xff] %v774
          %807 = vst [vmem:[%s200 + $0x68] sm:$0xff] %v775
          %808 = vst [vmem:[%s200 + $0x70] sm:$0xff] %v776
          %809 = vst [vmem:[%s200 + $0x78] sm:$0xff] %v777
          %810 = vst [vmem:[%s200 + $0x80] sm:$0xff] %v778
          %811 = vst [vmem:[%s200 + $0x88] sm:$0xff] %v779
          %812 = vst [vmem:[%s200 + $0x90] sm:$0xff] %v780
          %813 = vst [vmem:[%s200 + $0x98] sm:$0xff] %v781
          %814 = vst [vmem:[%s200 + $0xa0] sm:$0xff] %v782
          %815 = vst [vmem:[%s200 + $0xa8] sm:$0xff] %v783
          %816 = vst [vmem:[%s200 + $0xb0] sm:$0xff] %v784
          %817 = vst [vmem:[%s200 + $0xb8] sm:$0xff] %v785
          %818 = vst [vmem:[%s200 + $0xc0] sm:$0xff] %v786
          %819 = vst [vmem:[%s200 + $0xc8] sm:$0xff] %v787
          %820 = vst [vmem:[%s200 + $0xd0] sm:$0xff] %v788
          %821 = vst [vmem:[%s200 + $0xd8] sm:$0xff] %v789
          %822 = vst [vmem:[%s200 + $0xe0] sm:$0xff] %v790
          %823 = vst [vmem:[%s200 + $0xe8] sm:$0xff] %v791
          %824 = vst [vmem:[%s200 + $0xf0] sm:$0xff] %v792
          %825 = vst [vmem:[%s200 + $0xf8] sm:$0xff] %v793
        $region40: #{tpu_custom_call.1} parent=31 // pred_fallthru
          _
        %s826 = sand.u32 %s112, 1
        %s827 = scalar_lea.sflag [#allocation4], %s826
        %s828 = sand.u32 %s112, 1
        %s829 = smul.addr %s828, 256
        %s830 = scalar_lea.vmem [#allocation3], %s829
        // Predicated region
        $region41: #{tpu_custom_call.1} parent=31 // pred_check
          %p831 = pneg %p122
        $region42: #{tpu_custom_call.1} parent=31 // pred_check_branch
          %833 = sbr.rel (%p831) target = $region44
        $region43: #{tpu_custom_call.1} parent=31 // pred_region
          %s834 = smul.u32 32, %s21
          %s836 = ssub.s32 4096, 4096
          %837 = vsyncadd %s827, %s836
          %s838 = smul.addr %s834, 128
          %s839 = scalar_lea.hbm %s3, %s838
          %s840 = sshll.u32 %s830, 4
          %s841 = int_to_ptr.vmem [resolvable:$true] %s840
          %846 = dma.vmem_to_hbm [thread:$0]  %s841, 4096, %s839, %s827, 128, 128, 8
        $region44: #{tpu_custom_call.1} parent=31 // pred_fallthru
          _
      $region32: #{tpu_custom_call.1} parent=5 // pred_fallthru
        _
      %p847 = scmp.le.s32.totalorder 2, %s12
      // Predicated region
      $region45: #{tpu_custom_call.1} parent=5 // pred_check
        %p848 = pneg %p847
      $region46: #{tpu_custom_call.1} parent=5 // pred_check_branch
        %850 = sbr.rel (%p848) target = $region48
      $region47: #{tpu_custom_call.1} parent=5 // pred_region
        %s851 = ssub.s32 %s12, 2
        // Predicated region
        $region49: #{tpu_custom_call.1} parent=47 // pred_check
          %p852 = pneg %p128
        $region50: #{tpu_custom_call.1} parent=47 // pred_check_branch
          %854 = sbr.rel (%p852) target = $region52
        $region51: #{tpu_custom_call.1} parent=47 // pred_region
          %s855 = sand.u32 %s113, 1
          %s856 = scalar_lea.sflag [#allocation4], %s855
          %s857 = sand.u32 %s113, 1
          %s858 = smul.addr %s857, 256
          %s859 = scalar_lea.vmem [#allocation3], %s858
          %860 = dma.done %s856, 4096
        $region52: #{tpu_custom_call.1} parent=47 // pred_fallthru
          _
      $region48: #{tpu_custom_call.1} parent=5 // pred_fallthru
        _
    $region6: #{tpu_custom_call.1} parent=1 // loop_footer
      %s16 = sadd.s32 1, %s12
    $region7: #{tpu_custom_call.1} parent=1 // loop_footer_branch
      %11 = sbr.rel target = $region3
    $region8: #{tpu_custom_call.1} parent=1 // loop_exit
      _
    %861 = vsyncpa [#allocation4], 1
    %s862 = scalar_lea.sflag [#allocation4], 1
    %863 = vsyncpa %s862, 1

</llo_original>
